<compile_context>
chip_gen: v7x
topology: tpu7x:2x2x1
jax: 0.10.0
libtpu: 0.0.40
codegen_flags: <defaults>
</compile_context>

<pallas_src>
import jax
import jax.numpy as jnp
from jax.experimental import pallas as pl
from jax.experimental.pallas import tpu as pltpu

N_IN, N_HIDDEN, N_OUT = 2, 4, 1
_LANES = 128


def _mlp_kernel(p_ref, x_ref, o_ref):
    """Dense (sublane x lane) MLP tile.

    p_ref : (17,)         f32 SMEM  [w1(8) | b1(4) | 0.5*w2(4) | 0.5*b2(1)]
    x_ref : (2, rT, 128)  f32 VMEM  feature-major, batch on sublanes+lanes
    o_ref : (rT, 128)     f32 VMEM
    """
    x0 = x_ref[0]                                   # (rT, 128)
    x1 = x_ref[1]                                   # (rT, 128)

    acc = None
    for j in range(N_HIDDEN):                       # static unrolled loop
        h_j = jnp.tanh(p_ref[2 * j] * x0 + p_ref[2 * j + 1] * x1 + p_ref[8 + j])
        term = p_ref[12 + j] * h_j                  # 0.5*w2 already folded in
        acc = term if acc is None else acc + term
    z_half = acc + p_ref[16]                        # = 0.5 * (w2 @ h + b2)

    # sigmoid(z) = 0.5 + 0.5 * tanh(z/2)  (exact; tanh goes to the EUP)
    o_ref[...] = (0.5 * jnp.tanh(z_half) + 0.5).astype(o_ref.dtype)


def _pack_params(w1, b1, w2, b2):
    """Pack all parameters into one SMEM-friendly f32 vector; fold the 1/2 of
    the tanh-form sigmoid into the output-layer weights at trace time."""
    return jnp.concatenate([
        w1.reshape(-1), b1.reshape(-1),
        (0.5 * w2).reshape(-1), (0.5 * b2).reshape(-1),
    ]).astype(jnp.float32)                          # (17,)


def _choose_tile(R, block_rows):
    """Pick rows-of-128 per grid step.  Single block for tiny inputs;
    otherwise a multiple of 8, capped at block_rows (~512K elems, ~12 MB
    double-buffered -> fits v7x's 64 MiB VMEM), and halved when possible so
    the 'parallel' axis yields >= 2 steps for the megacore."""
    if R <= 8:
        return R, R
    rT = min(block_rows, -(-((R + 1) // 2) // 8) * 8)
    Rp = -(-R // rT) * rT
    return rT, Rp


def _forward_dense(xt, params, rT, Rp):
    """Fast path: xt is already feature-major (2, Rp, 128) f32.
    Returns (Rp, 128) f32 (batch element b lives at [b // 128, b % 128])."""
    n_elem = Rp * _LANES
    return pl.pallas_call(
        _mlp_kernel,
        out_shape=jax.ShapeDtypeStruct((Rp, _LANES), jnp.float32),
        grid=(Rp // rT,),
        in_specs=[pl.BlockSpec(memory_space=pltpu.MemorySpace.SMEM),
                  pl.BlockSpec((N_IN, rT, _LANES), lambda i: (0, i, 0))],
        out_specs=pl.BlockSpec((rT, _LANES), lambda i: (i, 0)),
        compiler_params=pltpu.CompilerParams(
            dimension_semantics=("parallel",),
            vmem_limit_bytes=48 * 1024 * 1024),
        cost_estimate=pl.CostEstimate(
            flops=27 * n_elem,            # 4 FMA pairs + output dot + epilogue
            transcendentals=5 * n_elem,   # 4 hidden tanh + 1 output tanh
            bytes_accessed=12 * n_elem + 68),
    )(params, xt)


def net_forward(x, w1, b1, w2, b2, *, block_rows=4096):
    """x: (B, 2) f32.  Weights in PyTorch (out, in) convention:
       w1: (4, 2), b1: (4,), w2: (1, 4), b2: (1,).  Returns (B, 1) f32."""
    B = x.shape[0]
    R = -(-B // _LANES)
    rT, Rp = _choose_tile(R, block_rows)
    Bp = Rp * _LANES

    # Single fused relayout pass: pad -> free row-major reshape -> transpose
    # to feature-major (2, Rp, 128).  Producers holding feature-major data
    # should call _forward_dense directly and skip this copy.
    xt = (jnp.pad(x.astype(jnp.float32), ((0, Bp - B), (0, 0)))
          .reshape(Rp, _LANES, N_IN)
          .transpose(2, 0, 1))                      # (2, Rp, 128)

    out = _forward_dense(xt, _pack_params(w1, b1, w2, b2), rT, Rp)
    # Free row-major flatten; slice/reshape only to match the (B, 1) API.
    return out.reshape(Bp)[:B].reshape(B, N_OUT)


def init_params(key):
    """PyTorch nn.Linear default init: U[-1/sqrt(fan_in), 1/sqrt(fan_in)],
    stored in PyTorch (out, in) convention."""
    k1, k2, k3, k4 = jax.random.split(key, 4)
    bound1 = 1.0 / jnp.sqrt(2.0)   # fan_in = 2
    bound2 = 1.0 / jnp.sqrt(4.0)   # fan_in = 4
    w1 = jax.random.uniform(k1, (N_HIDDEN, N_IN), jnp.float32, -bound1, bound1)
    b1 = jax.random.uniform(k2, (N_HIDDEN,), jnp.float32, -bound1, bound1)
    w2 = jax.random.uniform(k3, (N_OUT, N_HIDDEN), jnp.float32, -bound2, bound2)
    b2 = jax.random.uniform(k4, (N_OUT,), jnp.float32, -bound2, bound2)
    return w1, b1, w2, b2


def reference_forward(x, w1, b1, w2, b2):
    h = jnp.tanh(x @ w1.T + b1)
    return jax.nn.sigmoid(h @ w2.T + b2)


if __name__ == "__main__":
    key = jax.random.PRNGKey(0)
    kx, kp = jax.random.split(key)
    w1, b1, w2, b2 = init_params(kp)

    # Small deterministic checks: B=8 (single 128-lane row) and B=333
    # (non-multiple of 128 -> exercises padding and slice-back).
    for B in (8, 333):
        x = jax.random.normal(jax.random.fold_in(kx, B), (B, N_IN), jnp.float32)
        out = jax.block_until_ready(net_forward(x, w1, b1, w2, b2))
        ref = reference_forward(x, w1, b1, w2, b2)
        assert out.shape == (B, N_OUT)
        assert jnp.allclose(out, ref, atol=1e-5, rtol=1e-5), (B, out, ref)

    print("KERNEL_OK")
</pallas_src>

<mosaic_0001>
module attributes {stable_mosaic.version = 11 : i64} {
  func.func @_mlp_kernel(%arg0: i32, %arg1: memref<17xf32, #tpu.memory_space<smem>>, %arg2: memref<2x1x128xf32, #tpu.memory_space<vmem>>, %arg3: memref<1x128xf32, #tpu.memory_space<vmem>>) attributes {dimension_semantics = [#tpu.dimension_semantics<parallel>], iteration_bounds = array<i64: 1>, scalar_prefetch = 0 : i64, scratch_operands = 0 : i64, tpu.core_type = #tpu.core_type<tc>, window_params = [{transform_indices = @transform_0, window_bounds = array<i64: 17>}, {transform_indices = @transform_1, window_bounds = array<i64: 2, 1, 128>}, {transform_indices = @transform_2, window_bounds = array<i64: 1, 128>}]} {
    %c0 = arith.constant 0 : index
    %c0_0 = arith.constant 0 : index
    %c0_1 = arith.constant 0 : index
    %0 = vector.load %arg2[%c0, %c0_0, %c0_1] : memref<2x1x128xf32, #tpu.memory_space<vmem>>, vector<1x1x128xf32>
    %1 = vector.shape_cast %0 : vector<1x1x128xf32> to vector<1x128xf32>
    %c1 = arith.constant 1 : index
    %c0_2 = arith.constant 0 : index
    %c0_3 = arith.constant 0 : index
    %2 = vector.load %arg2[%c1, %c0_2, %c0_3] : memref<2x1x128xf32, #tpu.memory_space<vmem>>, vector<1x1x128xf32>
    %3 = vector.shape_cast %2 : vector<1x1x128xf32> to vector<1x128xf32>
    %c0_4 = arith.constant 0 : index
    %4 = memref.load %arg1[%c0_4] : memref<17xf32, #tpu.memory_space<smem>>
    %5 = vector.broadcast %4 : f32 to vector<1x128xf32>
    %6 = arith.mulf %5, %1 : vector<1x128xf32>
    %c1_5 = arith.constant 1 : index
    %7 = memref.load %arg1[%c1_5] : memref<17xf32, #tpu.memory_space<smem>>
    %8 = vector.broadcast %7 : f32 to vector<1x128xf32>
    %9 = arith.mulf %8, %3 : vector<1x128xf32>
    %10 = arith.addf %6, %9 : vector<1x128xf32>
    %c8 = arith.constant 8 : index
    %11 = memref.load %arg1[%c8] : memref<17xf32, #tpu.memory_space<smem>>
    %12 = vector.broadcast %11 : f32 to vector<1x128xf32>
    %13 = arith.addf %10, %12 : vector<1x128xf32>
    %14 = math.tanh %13 : vector<1x128xf32>
    %c12 = arith.constant 12 : index
    %15 = memref.load %arg1[%c12] : memref<17xf32, #tpu.memory_space<smem>>
    %16 = vector.broadcast %15 : f32 to vector<1x128xf32>
    %17 = arith.mulf %16, %14 : vector<1x128xf32>
    %c2 = arith.constant 2 : index
    %18 = memref.load %arg1[%c2] : memref<17xf32, #tpu.memory_space<smem>>
    %19 = vector.broadcast %18 : f32 to vector<1x128xf32>
    %20 = arith.mulf %19, %1 : vector<1x128xf32>
    %c3 = arith.constant 3 : index
    %21 = memref.load %arg1[%c3] : memref<17xf32, #tpu.memory_space<smem>>
    %22 = vector.broadcast %21 : f32 to vector<1x128xf32>
    %23 = arith.mulf %22, %3 : vector<1x128xf32>
    %24 = arith.addf %20, %23 : vector<1x128xf32>
    %c9 = arith.constant 9 : index
    %25 = memref.load %arg1[%c9] : memref<17xf32, #tpu.memory_space<smem>>
    %26 = vector.broadcast %25 : f32 to vector<1x128xf32>
    %27 = arith.addf %24, %26 : vector<1x128xf32>
    %28 = math.tanh %27 : vector<1x128xf32>
    %c13 = arith.constant 13 : index
    %29 = memref.load %arg1[%c13] : memref<17xf32, #tpu.memory_space<smem>>
    %30 = vector.broadcast %29 : f32 to vector<1x128xf32>
    %31 = arith.mulf %30, %28 : vector<1x128xf32>
    %32 = arith.addf %17, %31 : vector<1x128xf32>
    %c4 = arith.constant 4 : index
    %33 = memref.load %arg1[%c4] : memref<17xf32, #tpu.memory_space<smem>>
    %34 = vector.broadcast %33 : f32 to vector<1x128xf32>
    %35 = arith.mulf %34, %1 : vector<1x128xf32>
    %c5 = arith.constant 5 : index
    %36 = memref.load %arg1[%c5] : memref<17xf32, #tpu.memory_space<smem>>
    %37 = vector.broadcast %36 : f32 to vector<1x128xf32>
    %38 = arith.mulf %37, %3 : vector<1x128xf32>
    %39 = arith.addf %35, %38 : vector<1x128xf32>
    %c10 = arith.constant 10 : index
    %40 = memref.load %arg1[%c10] : memref<17xf32, #tpu.memory_space<smem>>
    %41 = vector.broadcast %40 : f32 to vector<1x128xf32>
    %42 = arith.addf %39, %41 : vector<1x128xf32>
    %43 = math.tanh %42 : vector<1x128xf32>
    %c14 = arith.constant 14 : index
    %44 = memref.load %arg1[%c14] : memref<17xf32, #tpu.memory_space<smem>>
    %45 = vector.broadcast %44 : f32 to vector<1x128xf32>
    %46 = arith.mulf %45, %43 : vector<1x128xf32>
    %47 = arith.addf %32, %46 : vector<1x128xf32>
    %c6 = arith.constant 6 : index
    %48 = memref.load %arg1[%c6] : memref<17xf32, #tpu.memory_space<smem>>
    %49 = vector.broadcast %48 : f32 to vector<1x128xf32>
    %50 = arith.mulf %49, %1 : vector<1x128xf32>
    %c7 = arith.constant 7 : index
    %51 = memref.load %arg1[%c7] : memref<17xf32, #tpu.memory_space<smem>>
    %52 = vector.broadcast %51 : f32 to vector<1x128xf32>
    %53 = arith.mulf %52, %3 : vector<1x128xf32>
    %54 = arith.addf %50, %53 : vector<1x128xf32>
    %c11 = arith.constant 11 : index
    %55 = memref.load %arg1[%c11] : memref<17xf32, #tpu.memory_space<smem>>
    %56 = vector.broadcast %55 : f32 to vector<1x128xf32>
    %57 = arith.addf %54, %56 : vector<1x128xf32>
    %58 = math.tanh %57 : vector<1x128xf32>
    %c15 = arith.constant 15 : index
    %59 = memref.load %arg1[%c15] : memref<17xf32, #tpu.memory_space<smem>>
    %60 = vector.broadcast %59 : f32 to vector<1x128xf32>
    %61 = arith.mulf %60, %58 : vector<1x128xf32>
    %62 = arith.addf %47, %61 : vector<1x128xf32>
    %c16 = arith.constant 16 : index
    %63 = memref.load %arg1[%c16] : memref<17xf32, #tpu.memory_space<smem>>
    %64 = vector.broadcast %63 : f32 to vector<1x128xf32>
    %65 = arith.addf %62, %64 : vector<1x128xf32>
    %66 = math.tanh %65 : vector<1x128xf32>
    %cst = arith.constant 5.000000e-01 : f32
    %67 = vector.broadcast %cst : f32 to vector<1x128xf32>
    %68 = arith.mulf %67, %66 : vector<1x128xf32>
    %cst_6 = arith.constant 5.000000e-01 : f32
    %69 = vector.broadcast %cst_6 : f32 to vector<1x128xf32>
    %70 = arith.addf %68, %69 : vector<1x128xf32>
    %c0_7 = arith.constant 0 : index
    %c0_8 = arith.constant 0 : index
    %71 = vector.load %arg3[%c0_7, %c0_8] : memref<1x128xf32, #tpu.memory_space<vmem>>, vector<1x128xf32>
    tpu.vector_store %arg3[%c0_7, %c0_8], %70 {strides = array<i32>} : memref<1x128xf32, #tpu.memory_space<vmem>>, vector<1x128xf32>,
    return
  }
  func.func @transform_0(%arg0: i32) -> i32 {
    %c0_i32 = arith.constant 0 : i32
    %c0_i32_0 = arith.constant 0 : i32
    return %c0_i32 : i32
  }
  func.func @transform_1(%arg0: i32) -> (i32, i32, i32) {
    %c0_i32 = arith.constant 0 : i32
    %c0_i32_0 = arith.constant 0 : i32
    %c0_i32_1 = arith.constant 0 : i32
    return %c0_i32, %arg0, %c0_i32_0 : i32, i32, i32
  }
  func.func @transform_2(%arg0: i32) -> (i32, i32) {
    %c0_i32 = arith.constant 0 : i32
    %c0_i32_0 = arith.constant 0 : i32
    return %arg0, %c0_i32 : i32, i32
  }
}

</mosaic_0001>

<llo_original>
// kernel: tpu_custom_call.1
$region0: #{tpu_custom_call.1}
  #allocation0 [shape = 'u32[]', space=smem, size = 0x4, offset = 0x4, fixed_abs, tag = 'smem constant byte address 0x4 - core index']
  #allocation1 [shape = 'u32[144,128]{1,0:T(1,128)}', space=vmem, size = 0x12000, scoped, tag = 'internal scratch']
  %s0 = inlined_call_operand.hbm [shape: f32[17], index: 0, kind: input, shape index: {}]
  %s1 = inlined_call_operand.vmem [shape: f32[2,1,128], index: 1, kind: input, shape index: {}]
  %s2 = inlined_call_operand.hbm [shape: f32[1,128], index: 2, kind: output, shape index: {}]
  %s3 = sld [smem:[#allocation0]]
  $region22: #{tpu_custom_call.1} parent=0
    _
  %s5 = ssub.s32 1, %s3
  %s6 = scalar_select 0, %s5, %s3
  $region1: #{tpu_custom_call.1} parent=0
    #allocation2 [shape = 'u8[512]{0}', space=smem, size = 0x200, scoped, tag = 'input window, operand 0, single buffered']
    #allocation3 [shape = 's32[1]{0}', space=sflag, size = 0x4, scoped, tag = 'scoped memory for tpu_custom_call.1']
    #allocation4 [shape = 's32[1]{0}', space=sflag, size = 0x4, scoped, tag = 'scoped memory for tpu_custom_call.1']
    #allocation5 [shape = 'u8[512]{0}', space=vmem, size = 0x400, scoped, tag = 'output window, operand 0, single buffered']
    %7 = vsyncpa [#allocation4], 0
    %8 = vsyncpa [#allocation3], 0
    // Predicated region
    $region2: #{tpu_custom_call.1} parent=1 // pred_check
      _
    $region3: #{tpu_custom_call.1} parent=1 // pred_check_branch
      %10 = sbr.rel (0) target = $region5
    $region4: #{tpu_custom_call.1} parent=1 // pred_region
      %s12 = ssub.s32 16, 16
      %13 = vsyncadd [#allocation4], %s12
      %16 = dma.hbm_to_smem %s0, 16, [#allocation2], [#allocation4]
    $region5: #{tpu_custom_call.1} parent=1 // pred_fallthru
      _
    // Predicated region
    $region6: #{tpu_custom_call.1} parent=1 // pred_check
      _
    $region7: #{tpu_custom_call.1} parent=1 // pred_check_branch
      %18 = sbr.rel (0) target = $region9
    $region8: #{tpu_custom_call.1} parent=1 // pred_region
      _
    $region9: #{tpu_custom_call.1} parent=1 // pred_fallthru
      _
    // Predicated region
    $region10: #{tpu_custom_call.1} parent=1 // pred_check
      _
    $region11: #{tpu_custom_call.1} parent=1 // pred_check_branch
      %20 = sbr.rel (0) target = $region13
    $region12: #{tpu_custom_call.1} parent=1 // pred_region
      %21 = dma.done [#allocation4], 16
    $region13: #{tpu_custom_call.1} parent=1 // pred_fallthru
      _
    %22 = sfence
    %v23 = vld [vmem:[%s1] sm:$0x1]
    %s24 = scalar_lea.vmem %s1, 1
    %v25 = vld [vmem:[%s24] sm:$0x1]
    %s26 = sld [smem:[#allocation2]]
    %v27 = vstv %s26
    %v28 = vmul.f32 %v27, %v23
    %s29 = sld [smem:[#allocation2 + $0x1]]
    %v30 = vstv %s29
    %v31 = vmul.f32 %v30, %v25
    %v32 = vadd.f32 %v28, %v31
    %s33 = sld [smem:[#allocation2 + $0x8]]
    %v34 = vstv %s33
    %v35 = vadd.f32 %v32, %v34
    %v36 = vtanh.pop %v35
    %s37 = sld [smem:[#allocation2 + $0xc]]
    %v38 = vstv %s37
    %v39 = vmul.f32 %v38, %v36
    %s40 = sld [smem:[#allocation2 + $0x2]]
    %v41 = vstv %s40
    %v42 = vmul.f32 %v41, %v23
    %s43 = sld [smem:[#allocation2 + $0x3]]
    %v44 = vstv %s43
    %v45 = vmul.f32 %v44, %v25
    %v46 = vadd.f32 %v42, %v45
    %s47 = sld [smem:[#allocation2 + $0x9]]
    %v48 = vstv %s47
    %v49 = vadd.f32 %v46, %v48
    %v50 = vtanh.pop %v49
    %s51 = sld [smem:[#allocation2 + $0xd]]
    %v52 = vstv %s51
    %v53 = vmul.f32 %v52, %v50
    %v54 = vadd.f32 %v39, %v53
    %s55 = sld [smem:[#allocation2 + $0x4]]
    %v56 = vstv %s55
    %v57 = vmul.f32 %v56, %v23
    %s58 = sld [smem:[#allocation2 + $0x5]]
    %v59 = vstv %s58
    %v60 = vmul.f32 %v59, %v25
    %v61 = vadd.f32 %v57, %v60
    %s62 = sld [smem:[#allocation2 + $0xa]]
    %v63 = vstv %s62
    %v64 = vadd.f32 %v61, %v63
    %v65 = vtanh.pop %v64
    %s66 = sld [smem:[#allocation2 + $0xe]]
    %v67 = vstv %s66
    %v68 = vmul.f32 %v67, %v65
    %v69 = vadd.f32 %v54, %v68
    %s70 = sld [smem:[#allocation2 + $0x6]]
    %v71 = vstv %s70
    %v72 = vmul.f32 %v71, %v23
    %s73 = sld [smem:[#allocation2 + $0x7]]
    %v74 = vstv %s73
    %v75 = vmul.f32 %v74, %v25
    %v76 = vadd.f32 %v72, %v75
    %s77 = sld [smem:[#allocation2 + $0xb]]
    %v78 = vstv %s77
    %v79 = vadd.f32 %v76, %v78
    %v80 = vtanh.pop %v79
    %s81 = sld [smem:[#allocation2 + $0xf]]
    %v82 = vstv %s81
    %v83 = vmul.f32 %v82, %v80
    %v84 = vadd.f32 %v69, %v83
    %s85 = sld [smem:[#allocation2 + $0x10]]
    %v86 = vstv %s85
    %v87 = vadd.f32 %v84, %v86
    %v88 = vtanh.pop %v87
    %v89 = vmul.f32 %v88, 0.5
    %v90 = vadd.f32 %v89, 0.5
    %91 = vst [vmem:[#allocation5] sm:$0x1] %v90
    // Predicated region
    $region14: #{tpu_custom_call.1} parent=1 // pred_check
      _
    $region15: #{tpu_custom_call.1} parent=1 // pred_check_branch
      %93 = sbr.rel (0) target = $region17
    $region16: #{tpu_custom_call.1} parent=1 // pred_region
      %s95 = ssub.s32 16, 16
      %96 = vsyncadd [#allocation3], %s95
      %s98 = sshll.u32 [#allocation5], 4
      %s99 = int_to_ptr.vmem [resolvable:$true] %s98
      %101 = dma.vmem_to_hbm [thread:$0]  %s99, 16, %s2, [#allocation3]
    $region17: #{tpu_custom_call.1} parent=1 // pred_fallthru
      _
    // Predicated region
    $region18: #{tpu_custom_call.1} parent=1 // pred_check
      _
    $region19: #{tpu_custom_call.1} parent=1 // pred_check_branch
      %103 = sbr.rel (0) target = $region21
    $region20: #{tpu_custom_call.1} parent=1 // pred_region
      %104 = dma.done [#allocation3], 16
    $region21: #{tpu_custom_call.1} parent=1 // pred_fallthru
      _
    %105 = vsyncpa [#allocation3], 1
    %106 = vsyncpa [#allocation4], 1

</llo_original>
